<compile_context>
chip_gen: v5e
topology: v5e:2x2
jax: 0.10.0
libtpu: 0.0.40
codegen_flags: <defaults>
</compile_context>

<pallas_src>
import functools

import jax
import jax.numpy as jnp
from jax.experimental import pallas as pl
from jax.experimental.pallas import tpu as pltpu

LANE = 128
SUBLANE = 8


# ----------------------------- Pallas kernel ------------------------------- #
def _quant_matmul_kernel(q_ref, x_ref, w_ref, b_ref, o_ref, *maybe_mm,
                         apply_relu, emit_minmax):
    """Fused: activation fake-quant (f32 VPU) -> bf16 integer-domain MXU matmul
    -> single rescale -> bias -> optional ReLU -> optional output min/max emission.

    q_ref (SMEM f32[4]): [1/delta_a, -zp_a, qmax_a - zp_a, delta_a * delta_w]
    x_ref : (tm, Kp)  f32 activation tile (K zero-padded to a lane multiple)
    w_ref : (Kp, Np)  bf16 pre-quantized weight (w_int - zp_w), lane-padded
    b_ref : (1, Np)   f32 bias, lane-padded with zeros
    o_ref : (tm, Np)  f32 output tile
    mm_ref: (8, 128)  f32 per-grid-step [min; max] of the output (optional)
    """
    inv_da = q_ref[0]
    lo = q_ref[1]          # -zp_a
    hi = q_ref[2]          # qmax_a - zp_a
    out_scale = q_ref[3]   # delta_a * delta_w

    # UniformAffineQuantizer fake-quant with the zero-point folded into the clip
    # bounds:  clip(round(x/d), -zp, qmax-zp) == (clip(round(x/d)+zp, 0, qmax) - zp).
    # Result is an exact integer in [-255, 255] -> exactly representable in bf16.
    x = x_ref[...]
    x_q = jnp.clip(jnp.round(x * inv_da), lo, hi).astype(jnp.bfloat16)

    # Single-pass bf16 MXU matmul with f32 accumulation; both quant deltas are
    # folded into one post-matmul multiply.
    acc = jnp.dot(x_q, w_ref[...], preferred_element_type=jnp.float32)
    out = acc * out_scale + b_ref[...]
    if apply_relu:
        out = jnp.maximum(out, 0.0)
    o_ref[...] = out

    if emit_minmax:
        # Running calibration for the *next* layer's activation quantizer, so the
        # wrapper never has to re-read this (lane-padded) output from HBM.
        # Padded lanes are exact zeros and the calibration clamps min<=0<=max,
        # so including them is a no-op.
        mm_ref = maybe_mm[0]
        mn = jnp.min(out)
        mx = jnp.max(out)
        row = jax.lax.broadcasted_iota(jnp.int32, (SUBLANE, LANE), 0)
        mm_ref[...] = jnp.where(row == 0, mn, jnp.where(row == 1, mx, 0.0))


def quant_matmul_pallas(x, w_q, b, qparams, *, apply_relu=False,
                        emit_minmax=False, tm=None):
    """x: (M, Kp) f32 with Kp % 128 == 0, M % 8 == 0; w_q: (Kp, Np) bf16 with
    Np % 128 == 0; b: (1, Np) f32; qparams: (4,) f32 (see kernel docstring)."""
    M, Kp = x.shape
    Kp2, Np = w_q.shape
    assert Kp == Kp2
    assert Kp % LANE == 0 and Np % LANE == 0, "pad K/N to 128-lane multiples"
    assert M % SUBLANE == 0, "pad M to a sublane multiple"

    if tm is None or tm > M or (M % tm) != 0 or (tm % SUBLANE) != 0:
        tm = M
    grid = (M // tm,)
    g = grid[0]

    kernel = functools.partial(_quant_matmul_kernel,
                               apply_relu=apply_relu, emit_minmax=emit_minmax)

    if emit_minmax:
        out_shape = (jax.ShapeDtypeStruct((M, Np), jnp.float32),
                     jax.ShapeDtypeStruct((g * SUBLANE, LANE), jnp.float32))
        out_specs = (pl.BlockSpec((tm, Np), lambda i: (i, 0)),
                     pl.BlockSpec((SUBLANE, LANE), lambda i: (i, 0)))
    else:
        out_shape = jax.ShapeDtypeStruct((M, Np), jnp.float32)
        out_specs = pl.BlockSpec((tm, Np), lambda i: (i, 0))

    cost = pl.CostEstimate(
        flops=int(2 * M * Kp * Np),
        transcendentals=0,
        bytes_accessed=int(M * Kp * 4 + g * Kp * Np * 2 + g * Np * 4 + M * Np * 4))

    # Actual double-buffered footprint here is ~1-3 MiB; 32 MiB scoped is explicit
    # headroom and stays under every generation's physical VMEM (>= 64 MiB).
    return pl.pallas_call(
        kernel,
        out_shape=out_shape,
        grid=grid,
        in_specs=[
            # quant scalars go down the scalar path (SMEM), no VMEM tile / vld slot
            pl.BlockSpec(memory_space=pltpu.MemorySpace.SMEM),
            pl.BlockSpec((tm, Kp), lambda i: (i, 0)),   # activation tile (lane-dense)
            pl.BlockSpec((Kp, Np), lambda i: (0, 0)),   # full pre-quantized weight
            pl.BlockSpec((1, Np), lambda i: (0, 0)),    # bias
        ],
        out_specs=out_specs,
        compiler_params=pltpu.CompilerParams(
            dimension_semantics=("parallel",),
            vmem_limit_bytes=32 * 1024 * 1024),
        cost_estimate=cost,
    )(qparams, x, w_q, b)


# --------------------------- JAX glue / setup ------------------------------ #
def uniform_affine_calib_from_minmax(t_min, t_max, n_bits):
    """Min/max calibration exactly like UniformAffineQuantizer's init."""
    x_min = jnp.minimum(t_min, 0.0)
    x_max = jnp.maximum(t_max, 0.0)
    delta = jnp.maximum((x_max - x_min) / (2.0 ** n_bits - 1.0), jnp.float32(1e-8))
    zp = jnp.round(-x_min / delta)
    return delta.astype(jnp.float32), zp.astype(jnp.float32)


def uniform_affine_calib(t, n_bits):
    return uniform_affine_calib_from_minmax(jnp.min(t), jnp.max(t), n_bits)


def quantize_weight_int_bf16(w, delta, zp, n_bits):
    """Weight fake-quant hoisted out of the kernel (done once per layer): returns
    (w_int - zp_w) as exact bf16 integers; delta_w is folded into the kernel's
    post-matmul out_scale."""
    qmax = 2.0 ** n_bits - 1.0
    w_int = jnp.clip(jnp.round(w * (1.0 / delta)) + zp, 0.0, qmax)
    return (w_int - zp).astype(jnp.bfloat16)


def make_act_qparams(delta_a, zp_a, delta_w, n_bits):
    qmax = 2.0 ** n_bits - 1.0
    return jnp.stack([1.0 / delta_a, -zp_a, qmax - zp_a,
                      delta_a * delta_w]).astype(jnp.float32)


def pad_to_multiple(a, axis, multiple):
    pad = (-a.shape[axis]) % multiple
    if pad == 0:
        return a
    cfg = [(0, 0)] * a.ndim
    cfg[axis] = (0, pad)
    return jnp.pad(a, cfg)


def _conv_tile_rows(M):
    """Split the conv matmul across TensorCores only on 2-TC parts (v7x);
    single-TC v5e/v6e run it as one grid step (no pointless serial steps)."""
    kind = ""
    try:
        kind = jax.devices()[0].device_kind.lower().replace(" ", "")
    except Exception:
        pass
    two_core = ("v7" in kind) or ("tpu7" in kind)
    if two_core and M % 2 == 0 and (M // 2) % SUBLANE == 0:
        return M // 2
    return M


def im2col_3x3_same(x):
    """x: NCHW -> (N*H*W, Cin*9), column order (Cin, kh, kw) to match PyTorch."""
    # TODO(synk): at production image sizes do patch extraction inside the kernel
    # (9 accumulated matmuls over an NHWC input) instead of materializing 9x the
    # activation bytes in HBM.
    N, C, H, W = x.shape
    xp = jnp.pad(x, ((0, 0), (0, 0), (1, 1), (1, 1)))
    cols = []
    for kh in range(3):
        for kw in range(3):
            cols.append(xp[:, :, kh:kh + H, kw:kw + W])        # (N, C, H, W)
    patches = jnp.stack(cols, axis=2)                          # (N, C, 9, H, W)
    patches = patches.transpose(0, 3, 4, 1, 2)                 # (N, H, W, C, 9)
    return patches.reshape(N * H * W, C * 9)


def quant_model_forward(x, params, n_bits=8):
    """Forward of the refactored (quantized) 2-layer backbone via Pallas."""
    N, C, H, W = x.shape
    conv_w, conv_b = params["conv_w"], params["conv_b"]        # (Cout,Cin,3,3),(Cout,)
    fc_w, fc_b = params["fc_w"], params["fc_b"]                # (Cout*H*W,10),(10,)
    Cout = conv_w.shape[0]
    num_classes = fc_w.shape[1]

    # ---- QuantModule #1: Conv2d(3x3, pad=1) + fused ReLU ----
    patches = im2col_3x3_same(x)                               # (N*H*W, Cin*9)
    w_mat = conv_w.reshape(Cout, C * 9).T                      # (Cin*9, Cout)
    da1, zpa1 = uniform_affine_calib(patches, n_bits)          # act calibration
    dw1, zpw1 = uniform_affine_calib(w_mat, n_bits)            # weight calibration

    # Lane-dense layouts: zero-pad K (Cin*9 = 36 -> 128) and the 8-wide output
    # dim to 128.  Padded activation columns fake-quantize to exact 0 and padded
    # weight rows/cols are exact 0, so this is bit-identical.
    patches_p = pad_to_multiple(patches, 1, LANE)
    w1_q = quantize_weight_int_bf16(w_mat, dw1, zpw1, n_bits)
    w1_q = pad_to_multiple(pad_to_multiple(w1_q, 0, LANE), 1, LANE)
    b1 = pad_to_multiple(conv_b.reshape(1, Cout), 1, LANE).astype(jnp.float32)
    q1 = make_act_qparams(da1, zpa1, dw1, n_bits)

    conv_tm = _conv_tile_rows(patches_p.shape[0])
    conv_out, conv_mm = quant_matmul_pallas(
        patches_p, w1_q, b1, q1, apply_relu=True, emit_minmax=True, tm=conv_tm)

    # Layer-2 activation calibration comes from the conv kernel's in-kernel
    # min/max (per grid step), so the padded conv output is not re-read for it.
    g = conv_mm.shape[0] // SUBLANE
    mm = conv_mm.reshape(g, SUBLANE, LANE)
    h1_min = jnp.min(mm[:, 0, 0])
    h1_max = jnp.max(mm[:, 1, 0])

    # conv_out rows are NHWC-ordered (n, h, w) x Cout: flatten directly and permute
    # the fc weight rows instead of transposing the activation back to NCHW.
    flat = conv_out[:, :Cout].reshape(N, H * W * Cout)

    # ---- QuantModule #2: Linear (last layer, no ReLU) ----
    fc_w_perm = (fc_w.reshape(Cout, H, W, num_classes)
                 .transpose(1, 2, 0, 3).reshape(H * W * Cout, num_classes))
    da2, zpa2 = uniform_affine_calib_from_minmax(h1_min, h1_max, n_bits)
    dw2, zpw2 = uniform_affine_calib(fc_w_perm, n_bits)
    w2_q = quantize_weight_int_bf16(fc_w_perm, dw2, zpw2, n_bits)
    w2_q = pad_to_multiple(pad_to_multiple(w2_q, 0, LANE), 1, LANE)
    b2 = pad_to_multiple(fc_b.reshape(1, num_classes), 1, LANE).astype(jnp.float32)
    q2 = make_act_qparams(da2, zpa2, dw2, n_bits)

    # Pad the tiny batch up to a full sublane so loads/stores are not row-masked;
    # zero rows fake-quantize to 0 and are sliced away below.
    flat_p = pad_to_multiple(pad_to_multiple(flat, 0, SUBLANE), 1, LANE)
    out = quant_matmul_pallas(flat_p, w2_q, b2, q2, apply_relu=False)
    return out[:N, :num_classes]


# ------------------------------ reference ---------------------------------- #
def _fake_quant_ref(t, n_bits):
    x_min = jnp.minimum(jnp.min(t), 0.0)
    x_max = jnp.maximum(jnp.max(t), 0.0)
    delta = jnp.maximum((x_max - x_min) / (2.0 ** n_bits - 1.0), jnp.float32(1e-8))
    zp = jnp.round(-x_min / delta)
    # Same reciprocal-multiply formulation as the kernel so rounding-boundary
    # behaviour matches bit-for-bit.
    ti = jnp.clip(jnp.round(t * (1.0 / delta)) + zp, 0.0, 2.0 ** n_bits - 1.0)
    return (ti - zp) * delta


def quant_model_forward_ref(x, params, n_bits=8):
    """Pure-jnp reference mirroring QuantModel semantics (PyTorch NCHW ordering)."""
    N, C, H, W = x.shape
    conv_w, conv_b = params["conv_w"], params["conv_b"]
    fc_w, fc_b = params["fc_w"], params["fc_b"]
    Cout = conv_w.shape[0]
    hp = jax.lax.Precision.HIGHEST

    patches = im2col_3x3_same(x)
    w_mat = conv_w.reshape(Cout, C * 9).T
    h1 = jnp.dot(_fake_quant_ref(patches, n_bits), _fake_quant_ref(w_mat, n_bits),
                 precision=hp)
    h1 = jnp.maximum(h1 + conv_b[None, :], 0.0)
    h1 = h1.reshape(N, H, W, Cout).transpose(0, 3, 1, 2).reshape(N, Cout * H * W)

    out = jnp.dot(_fake_quant_ref(h1, n_bits), _fake_quant_ref(fc_w, n_bits),
                  precision=hp)
    return out + fc_b[None, :]


# --------------------------------- main ------------------------------------ #
if __name__ == "__main__":
    key = jax.random.PRNGKey(0)
    k_x, k_cw, k_cb, k_fw, k_fb = jax.random.split(key, 5)

    N, Cin, H, W = 2, 4, 16, 16
    Cout, num_classes = 8, 10

    x = jax.random.normal(k_x, (N, Cin, H, W), dtype=jnp.float32)
    params = {
        "conv_w": 0.1 * jax.random.normal(k_cw, (Cout, Cin, 3, 3), dtype=jnp.float32),
        "conv_b": 0.01 * jax.random.normal(k_cb, (Cout,), dtype=jnp.float32),
        "fc_w": 0.02 * jax.random.normal(k_fw, (Cout * H * W, num_classes),
                                         dtype=jnp.float32),
        "fc_b": 0.01 * jax.random.normal(k_fb, (num_classes,), dtype=jnp.float32),
    }

    out = jax.block_until_ready(quant_model_forward(x, params))
    ref = jax.block_until_ready(quant_model_forward_ref(x, params))

    assert out.shape == (N, num_classes)
    max_err = float(jnp.max(jnp.abs(out - ref)))
    assert jnp.allclose(out, ref, atol=2e-3, rtol=1e-3), (
        f"Pallas output mismatch vs reference (max abs err {max_err})")

    print("KERNEL_OK")
</pallas_src>

<mosaic_0001>
module attributes {stable_mosaic.version = 11 : i64} {
  func.func @_quant_matmul_kernel(%arg0: i32, %arg1: memref<4xf32, #tpu.memory_space<smem>>, %arg2: memref<512x128xf32, #tpu.memory_space<vmem>>, %arg3: memref<128x128xbf16, #tpu.memory_space<vmem>>, %arg4: memref<1x128xf32, #tpu.memory_space<vmem>>, %arg5: memref<512x128xf32, #tpu.memory_space<vmem>>, %arg6: memref<8x128xf32, #tpu.memory_space<vmem>>) attributes {dimension_semantics = [#tpu.dimension_semantics<parallel>], iteration_bounds = array<i64: 1>, scalar_prefetch = 0 : i64, scratch_operands = 0 : i64, tpu.core_type = #tpu.core_type<tc>, window_params = [{transform_indices = @transform_0, window_bounds = array<i64: 4>}, {transform_indices = @transform_1, window_bounds = array<i64: 512, 128>}, {pipeline_mode = #tpu.pipeline_mode<synchronous>, transform_indices = @transform_2, window_bounds = array<i64: 128, 128>}, {pipeline_mode = #tpu.pipeline_mode<synchronous>, transform_indices = @transform_3, window_bounds = array<i64: 1, 128>}, {transform_indices = @transform_4, window_bounds = array<i64: 512, 128>}, {transform_indices = @transform_5, window_bounds = array<i64: 8, 128>}]} {
    %c0 = arith.constant 0 : index
    %0 = memref.load %arg1[%c0] : memref<4xf32, #tpu.memory_space<smem>>
    %c1 = arith.constant 1 : index
    %1 = memref.load %arg1[%c1] : memref<4xf32, #tpu.memory_space<smem>>
    %c2 = arith.constant 2 : index
    %2 = memref.load %arg1[%c2] : memref<4xf32, #tpu.memory_space<smem>>
    %c3 = arith.constant 3 : index
    %3 = memref.load %arg1[%c3] : memref<4xf32, #tpu.memory_space<smem>>
    %c0_0 = arith.constant 0 : index
    %c0_1 = arith.constant 0 : index
    %4 = vector.load %arg2[%c0_0, %c0_1] : memref<512x128xf32, #tpu.memory_space<vmem>>, vector<512x128xf32>
    %5 = vector.broadcast %0 : f32 to vector<512x128xf32>
    %6 = arith.mulf %4, %5 : vector<512x128xf32>
    %7 = math.roundeven %6 : vector<512x128xf32>
    %8 = vector.broadcast %1 : f32 to vector<512x128xf32>
    %9 = arith.maximumf %8, %7 : vector<512x128xf32>
    %10 = vector.broadcast %2 : f32 to vector<512x128xf32>
    %11 = arith.minimumf %10, %9 : vector<512x128xf32>
    %12 = arith.truncf %11 : vector<512x128xf32> to vector<512x128xbf16>
    %c0_2 = arith.constant 0 : index
    %c0_3 = arith.constant 0 : index
    %13 = vector.load %arg3[%c0_2, %c0_3] : memref<128x128xbf16, #tpu.memory_space<vmem>>, vector<128x128xbf16>
    %cst = arith.constant dense<0.000000e+00> : vector<512x128xf32>
    %14 = tpu.matmul %12, %13, %cst {dimension_numbers = #tpu.dot_dimension_numbers<[1], [0], [0], [1], [0, 0, 1, 1], [], []>} : vector<512x128xbf16>, vector<128x128xbf16>, vector<512x128xf32> -> vector<512x128xf32>
    %15 = vector.broadcast %3 : f32 to vector<512x128xf32>
    %16 = arith.mulf %14, %15 : vector<512x128xf32>
    %c0_4 = arith.constant 0 : index
    %c0_5 = arith.constant 0 : index
    %17 = vector.load %arg4[%c0_4, %c0_5] : memref<1x128xf32, #tpu.memory_space<vmem>>, vector<1x128xf32>
    %18 = vector.broadcast %17 : vector<1x128xf32> to vector<512x128xf32>
    %19 = arith.addf %16, %18 : vector<512x128xf32>
    %cst_6 = arith.constant 0.000000e+00 : f32
    %20 = vector.broadcast %cst_6 : f32 to vector<512x128xf32>
    %21 = arith.maximumf %19, %20 : vector<512x128xf32>
    %c0_7 = arith.constant 0 : index
    %c0_8 = arith.constant 0 : index
    %22 = vector.load %arg5[%c0_7, %c0_8] : memref<512x128xf32, #tpu.memory_space<vmem>>, vector<512x128xf32>
    tpu.vector_store %arg5[%c0_7, %c0_8], %21 {strides = array<i32>} : memref<512x128xf32, #tpu.memory_space<vmem>>, vector<512x128xf32>,
    %23 = vector.shape_cast %21 : vector<512x128xf32> to vector<1x512x128xf32>
    %cst_9 = arith.constant dense<0x7F800000> : vector<1xf32>
    %24 = vector.multi_reduction <minimumf>, %23, %cst_9 [1, 2] : vector<1x512x128xf32> to vector<1xf32>
    %25 = vector.shape_cast %24 : vector<1xf32> to vector<1x1x1xf32>
    %26 = vector.extract %25[0, 0, 0] : f32 from vector<1x1x1xf32>
    %27 = vector.shape_cast %21 : vector<512x128xf32> to vector<1x512x128xf32>
    %cst_10 = arith.constant dense<0xFF800000> : vector<1xf32>
    %28 = vector.multi_reduction <maximumf>, %27, %cst_10 [1, 2] : vector<1x512x128xf32> to vector<1xf32>
    %29 = vector.shape_cast %28 : vector<1xf32> to vector<1x1x1xf32>
    %30 = vector.extract %29[0, 0, 0] : f32 from vector<1x1x1xf32>
    %31 = tpu.iota {dimensions = array<i32: 0>} : vector<8x128xi32>
    %c0_i32 = arith.constant 0 : i32
    %32 = vector.broadcast %c0_i32 : i32 to vector<8x128xi32>
    %33 = arith.cmpi eq, %31, %32 : vector<8x128xi32>
    %c1_i32 = arith.constant 1 : i32
    %34 = vector.broadcast %c1_i32 : i32 to vector<8x128xi32>
    %35 = arith.cmpi eq, %31, %34 : vector<8x128xi32>
    %cst_11 = arith.constant 0.000000e+00 : f32
    %36 = vector.broadcast %30 : f32 to vector<8x128xf32>
    %37 = vector.broadcast %cst_11 : f32 to vector<8x128xf32>
    %38 = arith.select %35, %36, %37 : vector<8x128xi1>, vector<8x128xf32>
    %39 = vector.broadcast %26 : f32 to vector<8x128xf32>
    %40 = arith.select %33, %39, %38 : vector<8x128xi1>, vector<8x128xf32>
    %c0_12 = arith.constant 0 : index
    %c0_13 = arith.constant 0 : index
    %41 = vector.load %arg6[%c0_12, %c0_13] : memref<8x128xf32, #tpu.memory_space<vmem>>, vector<8x128xf32>
    tpu.vector_store %arg6[%c0_12, %c0_13], %40 {strides = array<i32>} : memref<8x128xf32, #tpu.memory_space<vmem>>, vector<8x128xf32>,
    return
  }
  func.func @transform_0(%arg0: i32) -> i32 {
    %c0_i32 = arith.constant 0 : i32
    %c0_i32_0 = arith.constant 0 : i32
    return %c0_i32 : i32
  }
  func.func @transform_1(%arg0: i32) -> (i32, i32) {
    %c0_i32 = arith.constant 0 : i32
    %c0_i32_0 = arith.constant 0 : i32
    return %arg0, %c0_i32 : i32, i32
  }
  func.func @transform_2(%arg0: i32) -> (i32, i32) {
    %c0_i32 = arith.constant 0 : i32
    %c0_i32_0 = arith.constant 0 : i32
    %c0_i32_1 = arith.constant 0 : i32
    return %c0_i32, %c0_i32_0 : i32, i32
  }
  func.func @transform_3(%arg0: i32) -> (i32, i32) {
    %c0_i32 = arith.constant 0 : i32
    %c0_i32_0 = arith.constant 0 : i32
    %c0_i32_1 = arith.constant 0 : i32
    return %c0_i32, %c0_i32_0 : i32, i32
  }
  func.func @transform_4(%arg0: i32) -> (i32, i32) {
    %c0_i32 = arith.constant 0 : i32
    %c0_i32_0 = arith.constant 0 : i32
    return %arg0, %c0_i32 : i32, i32
  }
  func.func @transform_5(%arg0: i32) -> (i32, i32) {
    %c0_i32 = arith.constant 0 : i32
    %c0_i32_0 = arith.constant 0 : i32
    return %arg0, %c0_i32 : i32, i32
  }
}

</mosaic_0001>

<llo_original>
// kernel: tpu_custom_call.1
$region0: #{tpu_custom_call.1}
  #allocation0 [shape = 'u32[]', space=smem, size = 0x4, offset = 0x4, fixed_abs, tag = 'smem constant byte address 0x4 - core index']
  #allocation1 [shape = 'u32[72,128]{1,0:T(1,128)}', space=vmem, size = 0x9000, scoped, tag = 'internal scratch']
  %s0 = inlined_call_operand.hbm [shape: f32[4], index: 0, kind: input, shape index: {}]
  %s1 = inlined_call_operand.hbm [shape: f32[512,128], index: 1, kind: input, shape index: {}]
  %s2 = inlined_call_operand.hbm [shape: bf16[128,128], index: 2, kind: input, shape index: {}]
  %s3 = inlined_call_operand.vmem [shape: f32[1,128], index: 3, kind: input, shape index: {}]
  %s4 = inlined_call_operand.hbm [shape: f32[512,128], index: 4, kind: output, shape index: {0}]
  %s5 = inlined_call_operand.hbm [shape: f32[8,128], index: 5, kind: output, shape index: {1}]
  %6 = xla_tuple %s4, %s5
  %s7 = sld [smem:[#allocation0]]
  $region46: #{tpu_custom_call.1} parent=0
    _
  %s9 = ssub.s32 1, %s7
  %s10 = scalar_select 0, %s9, %s7
  $region1: #{tpu_custom_call.1} parent=0
    #allocation2 [shape = 'u8[512]{0}', space=smem, size = 0x200, scoped, tag = 'input window, operand 0, single buffered']
    #allocation3 [shape = 's32[1]{0}', space=sflag, size = 0x4, scoped, tag = 'scoped memory for tpu_custom_call.1']
    #allocation4 [shape = 's32[1]{0}', space=sflag, size = 0x4, scoped, tag = 'scoped memory for tpu_custom_call.1']
    #allocation5 [shape = 's32[1]{0}', space=sflag, size = 0x4, scoped, tag = 'scoped memory for tpu_custom_call.1']
    #allocation6 [shape = 'u8[262144]{0}', space=vmem, size = 0x40000, scoped, tag = 'input window, operand 1, single buffered']
    #allocation7 [shape = 'u8[32768]{0}', space=vmem, size = 0x8000, scoped, tag = 'input window, operand 2, single buffered']
    #allocation8 [shape = 's32[1]{0}', space=sflag, size = 0x4, scoped, tag = 'scoped memory for tpu_custom_call.1']
    #allocation9 [shape = 'u8[262144]{0}', space=vmem, size = 0x40000, scoped, tag = 'output window, operand 0, single buffered']
    #allocation10 [shape = 'u8[4096]{0}', space=vmem, size = 0x1000, scoped, tag = 'output window, operand 1, single buffered']
    #allocation11 [shape = 's32[1]{0}', space=sflag, size = 0x4, scoped, tag = 'scoped memory for tpu_custom_call.1']
    %11 = vsyncpa [#allocation5], 0
    %12 = vsyncpa [#allocation3], 0
    %13 = vsyncpa [#allocation8], 0
    %14 = vsyncpa [#allocation4], 0
    %15 = vsyncpa [#allocation11], 0
    // Predicated region
    $region2: #{tpu_custom_call.1} parent=1 // pred_check
      _
    $region3: #{tpu_custom_call.1} parent=1 // pred_check_branch
      %17 = sbr.rel (0) target = $region5
    $region4: #{tpu_custom_call.1} parent=1 // pred_region
      %19 = vsyncadd [#allocation5], 0
      %s21 = sshll.u32 %s0, 4
      %s22 = int_to_ptr.hbm [resolvable:$true] %s21
      %24 = dma.hbm_to_smem %s22, 16, [#allocation2], [#allocation5]
    $region5: #{tpu_custom_call.1} parent=1 // pred_fallthru
      _
    // Predicated region
    $region6: #{tpu_custom_call.1} parent=1 // pred_check
      _
    $region7: #{tpu_custom_call.1} parent=1 // pred_check_branch
      %26 = sbr.rel (0) target = $region9
    $region8: #{tpu_custom_call.1} parent=1 // pred_region
      %28 = vsyncadd [#allocation3], 0
      %s29 = sshll.u32 %s1, 4
      %s30 = int_to_ptr.hbm [resolvable:$true] %s29
      %s31 = sshll.u32 [#allocation6], 4
      %s32 = int_to_ptr.vmem [resolvable:$true] %s31
      %37 = dma.hbm_to_vmem [thread:$0]  %s30, 8192, %s32, [#allocation3], 128, 128, 8
    $region9: #{tpu_custom_call.1} parent=1 // pred_fallthru
      _
    // Predicated region
    $region10: #{tpu_custom_call.1} parent=1 // pred_check
      _
    $region11: #{tpu_custom_call.1} parent=1 // pred_check_branch
      %39 = sbr.rel (0) target = $region13
    $region12: #{tpu_custom_call.1} parent=1 // pred_region
      %41 = vsyncadd [#allocation8], 0
      %s42 = sshll.u32 %s2, 4
      %s43 = int_to_ptr.hbm [resolvable:$true] %s42
      %s44 = sshll.u32 [#allocation7], 4
      %s45 = int_to_ptr.vmem [resolvable:$true] %s44
      %50 = dma.hbm_to_vmem [thread:$0]  %s43, 1024, %s45, [#allocation8], 64, 64, 4
    $region13: #{tpu_custom_call.1} parent=1 // pred_fallthru
      _
    // Predicated region
    $region14: #{tpu_custom_call.1} parent=1 // pred_check
      _
    $region15: #{tpu_custom_call.1} parent=1 // pred_check_branch
      %52 = sbr.rel (0) target = $region17
    $region16: #{tpu_custom_call.1} parent=1 // pred_region
      _
    $region17: #{tpu_custom_call.1} parent=1 // pred_fallthru
      _
    // Predicated region
    $region18: #{tpu_custom_call.1} parent=1 // pred_check
      _
    $region19: #{tpu_custom_call.1} parent=1 // pred_check_branch
      %54 = sbr.rel (0) target = $region21
    $region20: #{tpu_custom_call.1} parent=1 // pred_region
      %56 = dma.done [#allocation5], 16
    $region21: #{tpu_custom_call.1} parent=1 // pred_fallthru
      _
    // Predicated region
    $region22: #{tpu_custom_call.1} parent=1 // pred_check
      _
    $region23: #{tpu_custom_call.1} parent=1 // pred_check_branch
      %58 = sbr.rel (0) target = $region25
    $region24: #{tpu_custom_call.1} parent=1 // pred_region
      %60 = dma.done [#allocation3], 8192
    $region25: #{tpu_custom_call.1} parent=1 // pred_fallthru
      _
    // Predicated region
    $region26: #{tpu_custom_call.1} parent=1 // pred_check
      _
    $region27: #{tpu_custom_call.1} parent=1 // pred_check_branch
      %62 = sbr.rel (0) target = $region29
    $region28: #{tpu_custom_call.1} parent=1 // pred_region
      %64 = dma.done [#allocation8], 1024
    $region29: #{tpu_custom_call.1} parent=1 // pred_fallthru
      _
    %65 = sfence
    %s66 = sld [smem:[#allocation2]]
    %s67 = sld [smem:[#allocation2 + $0x1]]
    %s68 = sld [smem:[#allocation2 + $0x2]]
    %s69 = sld [smem:[#allocation2 + $0x3]]
    %v70 = vld [vmem:[#allocation6] sm:$0xff]
    %v71 = vld [vmem:[#allocation6 + $0x8] sm:$0xff]
    %v72 = vld [vmem:[#allocation6 + $0x10] sm:$0xff]
    %v73 = vld [vmem:[#allocation6 + $0x18] sm:$0xff]
    %v74 = vld [vmem:[#allocation6 + $0x20] sm:$0xff]
    %v75 = vld [vmem:[#allocation6 + $0x28] sm:$0xff]
    %v76 = vld [vmem:[#allocation6 + $0x30] sm:$0xff]
    %v77 = vld [vmem:[#allocation6 + $0x38] sm:$0xff]
    %v78 = vld [vmem:[#allocation6 + $0x40] sm:$0xff]
    %v79 = vld [vmem:[#allocation6 + $0x48] sm:$0xff]
    %v80 = vld [vmem:[#allocation6 + $0x50] sm:$0xff]
    %v81 = vld [vmem:[#allocation6 + $0x58] sm:$0xff]
    %v82 = vld [vmem:[#allocation6 + $0x60] sm:$0xff]
    %v83 = vld [vmem:[#allocation6 + $0x68] sm:$0xff]
    %v84 = vld [vmem:[#allocation6 + $0x70] sm:$0xff]
    %v85 = vld [vmem:[#allocation6 + $0x78] sm:$0xff]
    %v86 = vld [vmem:[#allocation6 + $0x80] sm:$0xff]
    %v87 = vld [vmem:[#allocation6 + $0x88] sm:$0xff]
    %v88 = vld [vmem:[#allocation6 + $0x90] sm:$0xff]
    %v89 = vld [vmem:[#allocation6 + $0x98] sm:$0xff]
    %v90 = vld [vmem:[#allocation6 + $0xa0] sm:$0xff]
    %v91 = vld [vmem:[#allocation6 + $0xa8] sm:$0xff]
    %v92 = vld [vmem:[#allocation6 + $0xb0] sm:$0xff]
    %v93 = vld [vmem:[#allocation6 + $0xb8] sm:$0xff]
    %v94 = vld [vmem:[#allocation6 + $0xc0] sm:$0xff]
    %v95 = vld [vmem:[#allocation6 + $0xc8] sm:$0xff]
    %v96 = vld [vmem:[#allocation6 + $0xd0] sm:$0xff]
    %v97 = vld [vmem:[#allocation6 + $0xd8] sm:$0xff]
    %v98 = vld [vmem:[#allocation6 + $0xe0] sm:$0xff]
    %v99 = vld [vmem:[#allocation6 + $0xe8] sm:$0xff]
    %v100 = vld [vmem:[#allocation6 + $0xf0] sm:$0xff]
    %v101 = vld [vmem:[#allocation6 + $0xf8] sm:$0xff]
    %v102 = vld [vmem:[#allocation6 + $0x100] sm:$0xff]
    %v103 = vld [vmem:[#allocation6 + $0x108] sm:$0xff]
    %v104 = vld [vmem:[#allocation6 + $0x110] sm:$0xff]
    %v105 = vld [vmem:[#allocation6 + $0x118] sm:$0xff]
    %v106 = vld [vmem:[#allocation6 + $0x120] sm:$0xff]
    %v107 = vld [vmem:[#allocation6 + $0x128] sm:$0xff]
    %v108 = vld [vmem:[#allocation6 + $0x130] sm:$0xff]
    %v109 = vld [vmem:[#allocation6 + $0x138] sm:$0xff]
    %v110 = vld [vmem:[#allocation6 + $0x140] sm:$0xff]
    %v111 = vld [vmem:[#allocation6 + $0x148] sm:$0xff]
    %v112 = vld [vmem:[#allocation6 + $0x150] sm:$0xff]
    %v113 = vld [vmem:[#allocation6 + $0x158] sm:$0xff]
    %v114 = vld [vmem:[#allocation6 + $0x160] sm:$0xff]
    %v115 = vld [vmem:[#allocation6 + $0x168] sm:$0xff]
    %v116 = vld [vmem:[#allocation6 + $0x170] sm:$0xff]
    %v117 = vld [vmem:[#allocation6 + $0x178] sm:$0xff]
    %v118 = vld [vmem:[#allocation6 + $0x180] sm:$0xff]
    %v119 = vld [vmem:[#allocation6 + $0x188] sm:$0xff]
    %v120 = vld [vmem:[#allocation6 + $0x190] sm:$0xff]
    %v121 = vld [vmem:[#allocation6 + $0x198] sm:$0xff]
    %v122 = vld [vmem:[#allocation6 + $0x1a0] sm:$0xff]
    %v123 = vld [vmem:[#allocation6 + $0x1a8] sm:$0xff]
    %v124 = vld [vmem:[#allocation6 + $0x1b0] sm:$0xff]
    %v125 = vld [vmem:[#allocation6 + $0x1b8] sm:$0xff]
    %v126 = vld [vmem:[#allocation6 + $0x1c0] sm:$0xff]
    %v127 = vld [vmem:[#allocation6 + $0x1c8] sm:$0xff]
    %v128 = vld [vmem:[#allocation6 + $0x1d0] sm:$0xff]
    %v129 = vld [vmem:[#allocation6 + $0x1d8] sm:$0xff]
    %v130 = vld [vmem:[#allocation6 + $0x1e0] sm:$0xff]
    %v131 = vld [vmem:[#allocation6 + $0x1e8] sm:$0xff]
    %v132 = vld [vmem:[#allocation6 + $0x1f0] sm:$0xff]
    %v133 = vld [vmem:[#allocation6 + $0x1f8] sm:$0xff]
    %v134 = vstv %s66
    %v135 = vmul.f32 %v70, %v134
    %v136 = vmul.f32 %v71, %v134
    %v137 = vmul.f32 %v72, %v134
    %v138 = vmul.f32 %v73, %v134
    %v139 = vmul.f32 %v74, %v134
    %v140 = vmul.f32 %v75, %v134
    %v141 = vmul.f32 %v76, %v134
    %v142 = vmul.f32 %v77, %v134
    %v143 = vmul.f32 %v78, %v134
    %v144 = vmul.f32 %v79, %v134
    %v145 = vmul.f32 %v80, %v134
    %v146 = vmul.f32 %v81, %v134
    %v147 = vmul.f32 %v82, %v134
    %v148 = vmul.f32 %v83, %v134
    %v149 = vmul.f32 %v84, %v134
    %v150 = vmul.f32 %v85, %v134
    %v151 = vmul.f32 %v86, %v134
    %v152 = vmul.f32 %v87, %v134
    %v153 = vmul.f32 %v88, %v134
    %v154 = vmul.f32 %v89, %v134
    %v155 = vmul.f32 %v90, %v134
    %v156 = vmul.f32 %v91, %v134
    %v157 = vmul.f32 %v92, %v134
    %v158 = vmul.f32 %v93, %v134
    %v159 = vmul.f32 %v94, %v134
    %v160 = vmul.f32 %v95, %v134
    %v161 = vmul.f32 %v96, %v134
    %v162 = vmul.f32 %v97, %v134
    %v163 = vmul.f32 %v98, %v134
    %v164 = vmul.f32 %v99, %v134
    %v165 = vmul.f32 %v100, %v134
    %v166 = vmul.f32 %v101, %v134
    %v167 = vmul.f32 %v102, %v134
    %v168 = vmul.f32 %v103, %v134
    %v169 = vmul.f32 %v104, %v134
    %v170 = vmul.f32 %v105, %v134
    %v171 = vmul.f32 %v106, %v134
    %v172 = vmul.f32 %v107, %v134
    %v173 = vmul.f32 %v108, %v134
    %v174 = vmul.f32 %v109, %v134
    %v175 = vmul.f32 %v110, %v134
    %v176 = vmul.f32 %v111, %v134
    %v177 = vmul.f32 %v112, %v134
    %v178 = vmul.f32 %v113, %v134
    %v179 = vmul.f32 %v114, %v134
    %v180 = vmul.f32 %v115, %v134
    %v181 = vmul.f32 %v116, %v134
    %v182 = vmul.f32 %v117, %v134
    %v183 = vmul.f32 %v118, %v134
    %v184 = vmul.f32 %v119, %v134
    %v185 = vmul.f32 %v120, %v134
    %v186 = vmul.f32 %v121, %v134
    %v187 = vmul.f32 %v122, %v134
    %v188 = vmul.f32 %v123, %v134
    %v189 = vmul.f32 %v124, %v134
    %v190 = vmul.f32 %v125, %v134
    %v191 = vmul.f32 %v126, %v134
    %v192 = vmul.f32 %v127, %v134
    %v193 = vmul.f32 %v128, %v134
    %v194 = vmul.f32 %v129, %v134
    %v195 = vmul.f32 %v130, %v134
    %v196 = vmul.f32 %v131, %v134
    %v197 = vmul.f32 %v132, %v134
    %v198 = vmul.f32 %v133, %v134
    %v199 = vround.ne.pseudo %v135
    %v200 = vround.ne.pseudo %v136
    %v201 = vround.ne.pseudo %v137
    %v202 = vround.ne.pseudo %v138
    %v203 = vround.ne.pseudo %v139
    %v204 = vround.ne.pseudo %v140
    %v205 = vround.ne.pseudo %v141
    %v206 = vround.ne.pseudo %v142
    %v207 = vround.ne.pseudo %v143
    %v208 = vround.ne.pseudo %v144
    %v209 = vround.ne.pseudo %v145
    %v210 = vround.ne.pseudo %v146
    %v211 = vround.ne.pseudo %v147
    %v212 = vround.ne.pseudo %v148
    %v213 = vround.ne.pseudo %v149
    %v214 = vround.ne.pseudo %v150
    %v215 = vround.ne.pseudo %v151
    %v216 = vround.ne.pseudo %v152
    %v217 = vround.ne.pseudo %v153
    %v218 = vround.ne.pseudo %v154
    %v219 = vround.ne.pseudo %v155
    %v220 = vround.ne.pseudo %v156
    %v221 = vround.ne.pseudo %v157
    %v222 = vround.ne.pseudo %v158
    %v223 = vround.ne.pseudo %v159
    %v224 = vround.ne.pseudo %v160
    %v225 = vround.ne.pseudo %v161
    %v226 = vround.ne.pseudo %v162
    %v227 = vround.ne.pseudo %v163
    %v228 = vround.ne.pseudo %v164
    %v229 = vround.ne.pseudo %v165
    %v230 = vround.ne.pseudo %v166
    %v231 = vround.ne.pseudo %v167
    %v232 = vround.ne.pseudo %v168
    %v233 = vround.ne.pseudo %v169
    %v234 = vround.ne.pseudo %v170
    %v235 = vround.ne.pseudo %v171
    %v236 = vround.ne.pseudo %v172
    %v237 = vround.ne.pseudo %v173
    %v238 = vround.ne.pseudo %v174
    %v239 = vround.ne.pseudo %v175
    %v240 = vround.ne.pseudo %v176
    %v241 = vround.ne.pseudo %v177
    %v242 = vround.ne.pseudo %v178
    %v243 = vround.ne.pseudo %v179
    %v244 = vround.ne.pseudo %v180
    %v245 = vround.ne.pseudo %v181
    %v246 = vround.ne.pseudo %v182
    %v247 = vround.ne.pseudo %v183
    %v248 = vround.ne.pseudo %v184
    %v249 = vround.ne.pseudo %v185
    %v250 = vround.ne.pseudo %v186
    %v251 = vround.ne.pseudo %v187
    %v252 = vround.ne.pseudo %v188
    %v253 = vround.ne.pseudo %v189
    %v254 = vround.ne.pseudo %v190
    %v255 = vround.ne.pseudo %v191
    %v256 = vround.ne.pseudo %v192
    %v257 = vround.ne.pseudo %v193
    %v258 = vround.ne.pseudo %v194
    %v259 = vround.ne.pseudo %v195
    %v260 = vround.ne.pseudo %v196
    %v261 = vround.ne.pseudo %v197
    %v262 = vround.ne.pseudo %v198
    %v263 = vstv %s67
    %v264 = vmax.f32 %v263, %v199
    %v265 = vmax.f32 %v263, %v200
    %v266 = vmax.f32 %v263, %v201
    %v267 = vmax.f32 %v263, %v202
    %v268 = vmax.f32 %v263, %v203
    %v269 = vmax.f32 %v263, %v204
    %v270 = vmax.f32 %v263, %v205
    %v271 = vmax.f32 %v263, %v206
    %v272 = vmax.f32 %v263, %v207
    %v273 = vmax.f32 %v263, %v208
    %v274 = vmax.f32 %v263, %v209
    %v275 = vmax.f32 %v263, %v210
    %v276 = vmax.f32 %v263, %v211
    %v277 = vmax.f32 %v263, %v212
    %v278 = vmax.f32 %v263, %v213
    %v279 = vmax.f32 %v263, %v214
    %v280 = vmax.f32 %v263, %v215
    %v281 = vmax.f32 %v263, %v216
    %v282 = vmax.f32 %v263, %v217
    %v283 = vmax.f32 %v263, %v218
    %v284 = vmax.f32 %v263, %v219
    %v285 = vmax.f32 %v263, %v220
    %v286 = vmax.f32 %v263, %v221
    %v287 = vmax.f32 %v263, %v222
    %v288 = vmax.f32 %v263, %v223
    %v289 = vmax.f32 %v263, %v224
    %v290 = vmax.f32 %v263, %v225
    %v291 = vmax.f32 %v263, %v226
    %v292 = vmax.f32 %v263, %v227
    %v293 = vmax.f32 %v263, %v228
    %v294 = vmax.f32 %v263, %v229
    %v295 = vmax.f32 %v263, %v230
    %v296 = vmax.f32 %v263, %v231
    %v297 = vmax.f32 %v263, %v232
    %v298 = vmax.f32 %v263, %v233
    %v299 = vmax.f32 %v263, %v234
    %v300 = vmax.f32 %v263, %v235
    %v301 = vmax.f32 %v263, %v236
    %v302 = vmax.f32 %v263, %v237
    %v303 = vmax.f32 %v263, %v238
    %v304 = vmax.f32 %v263, %v239
    %v305 = vmax.f32 %v263, %v240
    %v306 = vmax.f32 %v263, %v241
    %v307 = vmax.f32 %v263, %v242
    %v308 = vmax.f32 %v263, %v243
    %v309 = vmax.f32 %v263, %v244
    %v310 = vmax.f32 %v263, %v245
    %v311 = vmax.f32 %v263, %v246
    %v312 = vmax.f32 %v263, %v247
    %v313 = vmax.f32 %v263, %v248
    %v314 = vmax.f32 %v263, %v249
    %v315 = vmax.f32 %v263, %v250
    %v316 = vmax.f32 %v263, %v251
    %v317 = vmax.f32 %v263, %v252
    %v318 = vmax.f32 %v263, %v253
    %v319 = vmax.f32 %v263, %v254
    %v320 = vmax.f32 %v263, %v255
    %v321 = vmax.f32 %v263, %v256
    %v322 = vmax.f32 %v263, %v257
    %v323 = vmax.f32 %v263, %v258
    %v324 = vmax.f32 %v263, %v259
    %v325 = vmax.f32 %v263, %v260
    %v326 = vmax.f32 %v263, %v261
    %v327 = vmax.f32 %v263, %v262
    %v328 = vstv %s68
    %v329 = vmin.f32 %v328, %v264
    %v330 = vmin.f32 %v328, %v265
    %v331 = vmin.f32 %v328, %v266
    %v332 = vmin.f32 %v328, %v267
    %v333 = vmin.f32 %v328, %v268
    %v334 = vmin.f32 %v328, %v269
    %v335 = vmin.f32 %v328, %v270
    %v336 = vmin.f32 %v328, %v271
    %v337 = vmin.f32 %v328, %v272
    %v338 = vmin.f32 %v328, %v273
    %v339 = vmin.f32 %v328, %v274
    %v340 = vmin.f32 %v328, %v275
    %v341 = vmin.f32 %v328, %v276
    %v342 = vmin.f32 %v328, %v277
    %v343 = vmin.f32 %v328, %v278
    %v344 = vmin.f32 %v328, %v279
    %v345 = vmin.f32 %v328, %v280
    %v346 = vmin.f32 %v328, %v281
    %v347 = vmin.f32 %v328, %v282
    %v348 = vmin.f32 %v328, %v283
    %v349 = vmin.f32 %v328, %v284
    %v350 = vmin.f32 %v328, %v285
    %v351 = vmin.f32 %v328, %v286
    %v352 = vmin.f32 %v328, %v287
    %v353 = vmin.f32 %v328, %v288
    %v354 = vmin.f32 %v328, %v289
    %v355 = vmin.f32 %v328, %v290
    %v356 = vmin.f32 %v328, %v291
    %v357 = vmin.f32 %v328, %v292
    %v358 = vmin.f32 %v328, %v293
    %v359 = vmin.f32 %v328, %v294
    %v360 = vmin.f32 %v328, %v295
    %v361 = vmin.f32 %v328, %v296
    %v362 = vmin.f32 %v328, %v297
    %v363 = vmin.f32 %v328, %v298
    %v364 = vmin.f32 %v328, %v299
    %v365 = vmin.f32 %v328, %v300
    %v366 = vmin.f32 %v328, %v301
    %v367 = vmin.f32 %v328, %v302
    %v368 = vmin.f32 %v328, %v303
    %v369 = vmin.f32 %v328, %v304
    %v370 = vmin.f32 %v328, %v305
    %v371 = vmin.f32 %v328, %v306
    %v372 = vmin.f32 %v328, %v307
    %v373 = vmin.f32 %v328, %v308
    %v374 = vmin.f32 %v328, %v309
    %v375 = vmin.f32 %v328, %v310
    %v376 = vmin.f32 %v328, %v311
    %v377 = vmin.f32 %v328, %v312
    %v378 = vmin.f32 %v328, %v313
    %v379 = vmin.f32 %v328, %v314
    %v380 = vmin.f32 %v328, %v315
    %v381 = vmin.f32 %v328, %v316
    %v382 = vmin.f32 %v328, %v317
    %v383 = vmin.f32 %v328, %v318
    %v384 = vmin.f32 %v328, %v319
    %v385 = vmin.f32 %v328, %v320
    %v386 = vmin.f32 %v328, %v321
    %v387 = vmin.f32 %v328, %v322
    %v388 = vmin.f32 %v328, %v323
    %v389 = vmin.f32 %v328, %v324
    %v390 = vmin.f32 %v328, %v325
    %v391 = vmin.f32 %v328, %v326
    %v392 = vmin.f32 %v328, %v327
    %v393 = vpack.c.bf16 %v330, %v329
    %v394 = vpack.c.bf16 %v332, %v331
    %v395 = vpack.c.bf16 %v334, %v333
    %v396 = vpack.c.bf16 %v336, %v335
    %v397 = vpack.c.bf16 %v338, %v337
    %v398 = vpack.c.bf16 %v340, %v339
    %v399 = vpack.c.bf16 %v342, %v341
    %v400 = vpack.c.bf16 %v344, %v343
    %v401 = vpack.c.bf16 %v346, %v345
    %v402 = vpack.c.bf16 %v348, %v347
    %v403 = vpack.c.bf16 %v350, %v349
    %v404 = vpack.c.bf16 %v352, %v351
    %v405 = vpack.c.bf16 %v354, %v353
    %v406 = vpack.c.bf16 %v356, %v355
    %v407 = vpack.c.bf16 %v358, %v357
    %v408 = vpack.c.bf16 %v360, %v359
    %v409 = vpack.c.bf16 %v362, %v361
    %v410 = vpack.c.bf16 %v364, %v363
    %v411 = vpack.c.bf16 %v366, %v365
    %v412 = vpack.c.bf16 %v368, %v367
    %v413 = vpack.c.bf16 %v370, %v369
    %v414 = vpack.c.bf16 %v372, %v371
    %v415 = vpack.c.bf16 %v374, %v373
    %v416 = vpack.c.bf16 %v376, %v375
    %v417 = vpack.c.bf16 %v378, %v377
    %v418 = vpack.c.bf16 %v380, %v379
    %v419 = vpack.c.bf16 %v382, %v381
    %v420 = vpack.c.bf16 %v384, %v383
    %v421 = vpack.c.bf16 %v386, %v385
    %v422 = vpack.c.bf16 %v388, %v387
    %v423 = vpack.c.bf16 %v390, %v389
    %v424 = vpack.c.bf16 %v392, %v391
    %v425 = vld [vmem:[#allocation7] sm:$0xf]
    %v426 = vld [vmem:[#allocation7 + $0x4] sm:$0xf]
    %v427 = vld [vmem:[#allocation7 + $0x8] sm:$0xf]
    %v428 = vld [vmem:[#allocation7 + $0xc] sm:$0xf]
    %v429 = vld [vmem:[#allocation7 + $0x10] sm:$0xf]
    %v430 = vld [vmem:[#allocation7 + $0x14] sm:$0xf]
    %v431 = vld [vmem:[#allocation7 + $0x18] sm:$0xf]
    %v432 = vld [vmem:[#allocation7 + $0x1c] sm:$0xf]
    %v433 = vld [vmem:[#allocation7 + $0x20] sm:$0xf]
    %v434 = vld [vmem:[#allocation7 + $0x24] sm:$0xf]
    %v435 = vld [vmem:[#allocation7 + $0x28] sm:$0xf]
    %v436 = vld [vmem:[#allocation7 + $0x2c] sm:$0xf]
    %v437 = vld [vmem:[#allocation7 + $0x30] sm:$0xf]
    %v438 = vld [vmem:[#allocation7 + $0x34] sm:$0xf]
    %v439 = vld [vmem:[#allocation7 + $0x38] sm:$0xf]
    %v440 = vld [vmem:[#allocation7 + $0x3c] sm:$0xf]
    %v457 = vunpack.c.l.b16 %v425
    %v458 = vunpack.c.l.b16 %v426
    %v459 = vunpack.c.l.b16 %v427
    %v460 = vunpack.c.l.b16 %v428
    %v461 = vunpack.c.l.b16 %v429
    %v462 = vunpack.c.l.b16 %v430
    %v463 = vunpack.c.l.b16 %v431
    %v464 = vunpack.c.l.b16 %v432
    %v465 = vunpack.c.l.b16 %v433
    %v466 = vunpack.c.l.b16 %v434
    %v467 = vunpack.c.l.b16 %v435
    %v468 = vunpack.c.l.b16 %v436
    %v469 = vunpack.c.l.b16 %v437
    %v470 = vunpack.c.l.b16 %v438
    %v471 = vunpack.c.l.b16 %v439
    %v472 = vunpack.c.l.b16 %v440
    %v473 = vpack.c.b16 %v458, %v457
    %v474 = vpack.c.b16 %v460, %v459
    %v475 = vpack.c.b16 %v462, %v461
    %v476 = vpack.c.b16 %v464, %v463
    %v477 = vpack.c.b16 %v466, %v465
    %v478 = vpack.c.b16 %v468, %v467
    %v479 = vpack.c.b16 %v470, %v469
    %v480 = vpack.c.b16 %v472, %v471
    %489 = vmatpush.bf16.msra.mxu0 %v480
    %490 = vmatpush.bf16.msra.mxu0 %v479
    %491 = vmatpush.bf16.msra.mxu0 %v478
    %492 = vmatpush.bf16.msra.mxu0 %v477
    %493 = vmatpush.bf16.msra.mxu0 %v476
    %494 = vmatpush.bf16.msra.mxu0 %v475
    %495 = vmatpush.bf16.msra.mxu0 %v474
    %496 = vmatpush.bf16.msra.mxu0 %v473
    %497 = vmatmul.bf16.gmra.mxu0 %v393
    %v498 = vpop.f32.mrf.mxu0
    %v499 = vadd.f32 0.0, %v498
    %v500 = vpop.f32.mrf.mxu0
    %v501 = vadd.f32 0.0, %v500
    %502 = vmatmul.bf16.gmra.mxu0 %v394
    %v503 = vpop.f32.mrf.mxu0
    %v504 = vadd.f32 0.0, %v503
    %v505 = vpop.f32.mrf.mxu0
    %v506 = vadd.f32 0.0, %v505
    %507 = vmatmul.bf16.gmra.mxu0 %v395
    %v508 = vpop.f32.mrf.mxu0
    %v509 = vadd.f32 0.0, %v508
    %v510 = vpop.f32.mrf.mxu0
    %v511 = vadd.f32 0.0, %v510
    %512 = vmatmul.bf16.gmra.mxu0 %v396
    %v513 = vpop.f32.mrf.mxu0
    %v514 = vadd.f32 0.0, %v513
    %v515 = vpop.f32.mrf.mxu0
    %v516 = vadd.f32 0.0, %v515
    %517 = vmatmul.bf16.gmra.mxu0 %v397
    %v518 = vpop.f32.mrf.mxu0
    %v519 = vadd.f32 0.0, %v518
    %v520 = vpop.f32.mrf.mxu0
    %v521 = vadd.f32 0.0, %v520
    %522 = vmatmul.bf16.gmra.mxu0 %v398
    %v523 = vpop.f32.mrf.mxu0
    %v524 = vadd.f32 0.0, %v523
    %v525 = vpop.f32.mrf.mxu0
    %v526 = vadd.f32 0.0, %v525
    %527 = vmatmul.bf16.gmra.mxu0 %v399
    %v528 = vpop.f32.mrf.mxu0
    %v529 = vadd.f32 0.0, %v528
    %v530 = vpop.f32.mrf.mxu0
    %v531 = vadd.f32 0.0, %v530
    %532 = vmatmul.bf16.gmra.mxu0 %v400
    %v533 = vpop.f32.mrf.mxu0
    %v534 = vadd.f32 0.0, %v533
    %v535 = vpop.f32.mrf.mxu0
    %v536 = vadd.f32 0.0, %v535
    %537 = vmatmul.bf16.gmra.mxu0 %v401
    %v538 = vpop.f32.mrf.mxu0
    %v539 = vadd.f32 0.0, %v538
    %v540 = vpop.f32.mrf.mxu0
    %v541 = vadd.f32 0.0, %v540
    %542 = vmatmul.bf16.gmra.mxu0 %v402
    %v543 = vpop.f32.mrf.mxu0
    %v544 = vadd.f32 0.0, %v543
    %v545 = vpop.f32.mrf.mxu0
    %v546 = vadd.f32 0.0, %v545
    %547 = vmatmul.bf16.gmra.mxu0 %v403
    %v548 = vpop.f32.mrf.mxu0
    %v549 = vadd.f32 0.0, %v548
    %v550 = vpop.f32.mrf.mxu0
    %v551 = vadd.f32 0.0, %v550
    %552 = vmatmul.bf16.gmra.mxu0 %v404
    %v553 = vpop.f32.mrf.mxu0
    %v554 = vadd.f32 0.0, %v553
    %v555 = vpop.f32.mrf.mxu0
    %v556 = vadd.f32 0.0, %v555
    %557 = vmatmul.bf16.gmra.mxu0 %v405
    %v558 = vpop.f32.mrf.mxu0
    %v559 = vadd.f32 0.0, %v558
    %v560 = vpop.f32.mrf.mxu0
    %v561 = vadd.f32 0.0, %v560
    %562 = vmatmul.bf16.gmra.mxu0 %v406
    %v563 = vpop.f32.mrf.mxu0
    %v564 = vadd.f32 0.0, %v563
    %v565 = vpop.f32.mrf.mxu0
    %v566 = vadd.f32 0.0, %v565
    %567 = vmatmul.bf16.gmra.mxu0 %v407
    %v568 = vpop.f32.mrf.mxu0
    %v569 = vadd.f32 0.0, %v568
    %v570 = vpop.f32.mrf.mxu0
    %v571 = vadd.f32 0.0, %v570
    %572 = vmatmul.bf16.gmra.mxu0 %v408
    %v573 = vpop.f32.mrf.mxu0
    %v574 = vadd.f32 0.0, %v573
    %v575 = vpop.f32.mrf.mxu0
    %v576 = vadd.f32 0.0, %v575
    %577 = vmatmul.bf16.gmra.mxu0 %v409
    %v578 = vpop.f32.mrf.mxu0
    %v579 = vadd.f32 0.0, %v578
    %v580 = vpop.f32.mrf.mxu0
    %v581 = vadd.f32 0.0, %v580
    %582 = vmatmul.bf16.gmra.mxu0 %v410
    %v583 = vpop.f32.mrf.mxu0
    %v584 = vadd.f32 0.0, %v583
    %v585 = vpop.f32.mrf.mxu0
    %v586 = vadd.f32 0.0, %v585
    %587 = vmatmul.bf16.gmra.mxu0 %v411
    %v588 = vpop.f32.mrf.mxu0
    %v589 = vadd.f32 0.0, %v588
    %v590 = vpop.f32.mrf.mxu0
    %v591 = vadd.f32 0.0, %v590
    %592 = vmatmul.bf16.gmra.mxu0 %v412
    %v593 = vpop.f32.mrf.mxu0
    %v594 = vadd.f32 0.0, %v593
    %v595 = vpop.f32.mrf.mxu0
    %v596 = vadd.f32 0.0, %v595
    %597 = vmatmul.bf16.gmra.mxu0 %v413
    %v598 = vpop.f32.mrf.mxu0
    %v599 = vadd.f32 0.0, %v598
    %v600 = vpop.f32.mrf.mxu0
    %v601 = vadd.f32 0.0, %v600
    %602 = vmatmul.bf16.gmra.mxu0 %v414
    %v603 = vpop.f32.mrf.mxu0
    %v604 = vadd.f32 0.0, %v603
    %v605 = vpop.f32.mrf.mxu0
    %v606 = vadd.f32 0.0, %v605
    %607 = vmatmul.bf16.gmra.mxu0 %v415
    %v608 = vpop.f32.mrf.mxu0
    %v609 = vadd.f32 0.0, %v608
    %v610 = vpop.f32.mrf.mxu0
    %v611 = vadd.f32 0.0, %v610
    %612 = vmatmul.bf16.gmra.mxu0 %v416
    %v613 = vpop.f32.mrf.mxu0
    %v614 = vadd.f32 0.0, %v613
    %v615 = vpop.f32.mrf.mxu0
    %v616 = vadd.f32 0.0, %v615
    %617 = vmatmul.bf16.gmra.mxu0 %v417
    %v618 = vpop.f32.mrf.mxu0
    %v619 = vadd.f32 0.0, %v618
    %v620 = vpop.f32.mrf.mxu0
    %v621 = vadd.f32 0.0, %v620
    %622 = vmatmul.bf16.gmra.mxu0 %v418
    %v623 = vpop.f32.mrf.mxu0
    %v624 = vadd.f32 0.0, %v623
    %v625 = vpop.f32.mrf.mxu0
    %v626 = vadd.f32 0.0, %v625
    %627 = vmatmul.bf16.gmra.mxu0 %v419
    %v628 = vpop.f32.mrf.mxu0
    %v629 = vadd.f32 0.0, %v628
    %v630 = vpop.f32.mrf.mxu0
    %v631 = vadd.f32 0.0, %v630
    %632 = vmatmul.bf16.gmra.mxu0 %v420
    %v633 = vpop.f32.mrf.mxu0
    %v634 = vadd.f32 0.0, %v633
    %v635 = vpop.f32.mrf.mxu0
    %v636 = vadd.f32 0.0, %v635
    %637 = vmatmul.bf16.gmra.mxu0 %v421
    %v638 = vpop.f32.mrf.mxu0
    %v639 = vadd.f32 0.0, %v638
    %v640 = vpop.f32.mrf.mxu0
    %v641 = vadd.f32 0.0, %v640
    %642 = vmatmul.bf16.gmra.mxu0 %v422
    %v643 = vpop.f32.mrf.mxu0
    %v644 = vadd.f32 0.0, %v643
    %v645 = vpop.f32.mrf.mxu0
    %v646 = vadd.f32 0.0, %v645
    %647 = vmatmul.bf16.gmra.mxu0 %v423
    %v648 = vpop.f32.mrf.mxu0
    %v649 = vadd.f32 0.0, %v648
    %v650 = vpop.f32.mrf.mxu0
    %v651 = vadd.f32 0.0, %v650
    %652 = vmatmul.bf16.gmra.mxu0 %v424
    %v653 = vpop.f32.mrf.mxu0
    %v654 = vadd.f32 0.0, %v653
    %v655 = vpop.f32.mrf.mxu0
    %v656 = vadd.f32 0.0, %v655
    %657 = vdwg.mxu0
    %v658 = vstv %s69
    %v659 = vmul.f32 %v499, %v658
    %v660 = vmul.f32 %v501, %v658
    %v661 = vmul.f32 %v504, %v658
    %v662 = vmul.f32 %v506, %v658
    %v663 = vmul.f32 %v509, %v658
    %v664 = vmul.f32 %v511, %v658
    %v665 = vmul.f32 %v514, %v658
    %v666 = vmul.f32 %v516, %v658
    %v667 = vmul.f32 %v519, %v658
    %v668 = vmul.f32 %v521, %v658
    %v669 = vmul.f32 %v524, %v658
    %v670 = vmul.f32 %v526, %v658
    %v671 = vmul.f32 %v529, %v658
    %v672 = vmul.f32 %v531, %v658
    %v673 = vmul.f32 %v534, %v658
    %v674 = vmul.f32 %v536, %v658
    %v675 = vmul.f32 %v539, %v658
    %v676 = vmul.f32 %v541, %v658
    %v677 = vmul.f32 %v544, %v658
    %v678 = vmul.f32 %v546, %v658
    %v679 = vmul.f32 %v549, %v658
    %v680 = vmul.f32 %v551, %v658
    %v681 = vmul.f32 %v554, %v658
    %v682 = vmul.f32 %v556, %v658
    %v683 = vmul.f32 %v559, %v658
    %v684 = vmul.f32 %v561, %v658
    %v685 = vmul.f32 %v564, %v658
    %v686 = vmul.f32 %v566, %v658
    %v687 = vmul.f32 %v569, %v658
    %v688 = vmul.f32 %v571, %v658
    %v689 = vmul.f32 %v574, %v658
    %v690 = vmul.f32 %v576, %v658
    %v691 = vmul.f32 %v579, %v658
    %v692 = vmul.f32 %v581, %v658
    %v693 = vmul.f32 %v584, %v658
    %v694 = vmul.f32 %v586, %v658
    %v695 = vmul.f32 %v589, %v658
    %v696 = vmul.f32 %v591, %v658
    %v697 = vmul.f32 %v594, %v658
    %v698 = vmul.f32 %v596, %v658
    %v699 = vmul.f32 %v599, %v658
    %v700 = vmul.f32 %v601, %v658
    %v701 = vmul.f32 %v604, %v658
    %v702 = vmul.f32 %v606, %v658
    %v703 = vmul.f32 %v609, %v658
    %v704 = vmul.f32 %v611, %v658
    %v705 = vmul.f32 %v614, %v658
    %v706 = vmul.f32 %v616, %v658
    %v707 = vmul.f32 %v619, %v658
    %v708 = vmul.f32 %v621, %v658
    %v709 = vmul.f32 %v624, %v658
    %v710 = vmul.f32 %v626, %v658
    %v711 = vmul.f32 %v629, %v658
    %v712 = vmul.f32 %v631, %v658
    %v713 = vmul.f32 %v634, %v658
    %v714 = vmul.f32 %v636, %v658
    %v715 = vmul.f32 %v639, %v658
    %v716 = vmul.f32 %v641, %v658
    %v717 = vmul.f32 %v644, %v658
    %v718 = vmul.f32 %v646, %v658
    %v719 = vmul.f32 %v649, %v658
    %v720 = vmul.f32 %v651, %v658
    %v721 = vmul.f32 %v654, %v658
    %v722 = vmul.f32 %v656, %v658
    %v723 = vld [vmem:[%s3] sm:$0x1]
    %v725 = vperm.slane %v723, 0
    %v727 = vadd.f32 %v659, %v725
    %v728 = vadd.f32 %v660, %v725
    %v729 = vadd.f32 %v661, %v725
    %v730 = vadd.f32 %v662, %v725
    %v731 = vadd.f32 %v663, %v725
    %v732 = vadd.f32 %v664, %v725
    %v733 = vadd.f32 %v665, %v725
    %v734 = vadd.f32 %v666, %v725
    %v735 = vadd.f32 %v667, %v725
    %v736 = vadd.f32 %v668, %v725
    %v737 = vadd.f32 %v669, %v725
    %v738 = vadd.f32 %v670, %v725
    %v739 = vadd.f32 %v671, %v725
    %v740 = vadd.f32 %v672, %v725
    %v741 = vadd.f32 %v673, %v725
    %v742 = vadd.f32 %v674, %v725
    %v743 = vadd.f32 %v675, %v725
    %v744 = vadd.f32 %v676, %v725
    %v745 = vadd.f32 %v677, %v725
    %v746 = vadd.f32 %v678, %v725
    %v747 = vadd.f32 %v679, %v725
    %v748 = vadd.f32 %v680, %v725
    %v749 = vadd.f32 %v681, %v725
    %v750 = vadd.f32 %v682, %v725
    %v751 = vadd.f32 %v683, %v725
    %v752 = vadd.f32 %v684, %v725
    %v753 = vadd.f32 %v685, %v725
    %v754 = vadd.f32 %v686, %v725
    %v755 = vadd.f32 %v687, %v725
    %v756 = vadd.f32 %v688, %v725
    %v757 = vadd.f32 %v689, %v725
    %v758 = vadd.f32 %v690, %v725
    %v759 = vadd.f32 %v691, %v725
    %v760 = vadd.f32 %v692, %v725
    %v761 = vadd.f32 %v693, %v725
    %v762 = vadd.f32 %v694, %v725
    %v763 = vadd.f32 %v695, %v725
    %v764 = vadd.f32 %v696, %v725
    %v765 = vadd.f32 %v697, %v725
    %v766 = vadd.f32 %v698, %v725
    %v767 = vadd.f32 %v699, %v725
    %v768 = vadd.f32 %v700, %v725
    %v769 = vadd.f32 %v701, %v725
    %v770 = vadd.f32 %v702, %v725
    %v771 = vadd.f32 %v703, %v725
    %v772 = vadd.f32 %v704, %v725
    %v773 = vadd.f32 %v705, %v725
    %v774 = vadd.f32 %v706, %v725
    %v775 = vadd.f32 %v707, %v725
    %v776 = vadd.f32 %v708, %v725
    %v777 = vadd.f32 %v709, %v725
    %v778 = vadd.f32 %v710, %v725
    %v779 = vadd.f32 %v711, %v725
    %v780 = vadd.f32 %v712, %v725
    %v781 = vadd.f32 %v713, %v725
    %v782 = vadd.f32 %v714, %v725
    %v783 = vadd.f32 %v715, %v725
    %v784 = vadd.f32 %v716, %v725
    %v785 = vadd.f32 %v717, %v725
    %v786 = vadd.f32 %v718, %v725
    %v787 = vadd.f32 %v719, %v725
    %v788 = vadd.f32 %v720, %v725
    %v789 = vadd.f32 %v721, %v725
    %v790 = vadd.f32 %v722, %v725
    %v791 = vmax.f32 %v727, 0.0
    %v792 = vmax.f32 %v728, 0.0
    %v793 = vmax.f32 %v729, 0.0
    %v794 = vmax.f32 %v730, 0.0
    %v795 = vmax.f32 %v731, 0.0
    %v796 = vmax.f32 %v732, 0.0
    %v797 = vmax.f32 %v733, 0.0
    %v798 = vmax.f32 %v734, 0.0
    %v799 = vmax.f32 %v735, 0.0
    %v800 = vmax.f32 %v736, 0.0
    %v801 = vmax.f32 %v737, 0.0
    %v802 = vmax.f32 %v738, 0.0
    %v803 = vmax.f32 %v739, 0.0
    %v804 = vmax.f32 %v740, 0.0
    %v805 = vmax.f32 %v741, 0.0
    %v806 = vmax.f32 %v742, 0.0
    %v807 = vmax.f32 %v743, 0.0
    %v808 = vmax.f32 %v744, 0.0
    %v809 = vmax.f32 %v745, 0.0
    %v810 = vmax.f32 %v746, 0.0
    %v811 = vmax.f32 %v747, 0.0
    %v812 = vmax.f32 %v748, 0.0
    %v813 = vmax.f32 %v749, 0.0
    %v814 = vmax.f32 %v750, 0.0
    %v815 = vmax.f32 %v751, 0.0
    %v816 = vmax.f32 %v752, 0.0
    %v817 = vmax.f32 %v753, 0.0
    %v818 = vmax.f32 %v754, 0.0
    %v819 = vmax.f32 %v755, 0.0
    %v820 = vmax.f32 %v756, 0.0
    %v821 = vmax.f32 %v757, 0.0
    %v822 = vmax.f32 %v758, 0.0
    %v823 = vmax.f32 %v759, 0.0
    %v824 = vmax.f32 %v760, 0.0
    %v825 = vmax.f32 %v761, 0.0
    %v826 = vmax.f32 %v762, 0.0
    %v827 = vmax.f32 %v763, 0.0
    %v828 = vmax.f32 %v764, 0.0
    %v829 = vmax.f32 %v765, 0.0
    %v830 = vmax.f32 %v766, 0.0
    %v831 = vmax.f32 %v767, 0.0
    %v832 = vmax.f32 %v768, 0.0
    %v833 = vmax.f32 %v769, 0.0
    %v834 = vmax.f32 %v770, 0.0
    %v835 = vmax.f32 %v771, 0.0
    %v836 = vmax.f32 %v772, 0.0
    %v837 = vmax.f32 %v773, 0.0
    %v838 = vmax.f32 %v774, 0.0
    %v839 = vmax.f32 %v775, 0.0
    %v840 = vmax.f32 %v776, 0.0
    %v841 = vmax.f32 %v777, 0.0
    %v842 = vmax.f32 %v778, 0.0
    %v843 = vmax.f32 %v779, 0.0
    %v844 = vmax.f32 %v780, 0.0
    %v845 = vmax.f32 %v781, 0.0
    %v846 = vmax.f32 %v782, 0.0
    %v847 = vmax.f32 %v783, 0.0
    %v848 = vmax.f32 %v784, 0.0
    %v849 = vmax.f32 %v785, 0.0
    %v850 = vmax.f32 %v786, 0.0
    %v851 = vmax.f32 %v787, 0.0
    %v852 = vmax.f32 %v788, 0.0
    %v853 = vmax.f32 %v789, 0.0
    %v854 = vmax.f32 %v790, 0.0
    %855 = vst [vmem:[#allocation9] sm:$0xff] %v791
    %856 = vst [vmem:[#allocation9 + $0x8] sm:$0xff] %v792
    %857 = vst [vmem:[#allocation9 + $0x10] sm:$0xff] %v793
    %858 = vst [vmem:[#allocation9 + $0x18] sm:$0xff] %v794
    %859 = vst [vmem:[#allocation9 + $0x20] sm:$0xff] %v795
    %860 = vst [vmem:[#allocation9 + $0x28] sm:$0xff] %v796
    %861 = vst [vmem:[#allocation9 + $0x30] sm:$0xff] %v797
    %862 = vst [vmem:[#allocation9 + $0x38] sm:$0xff] %v798
    %863 = vst [vmem:[#allocation9 + $0x40] sm:$0xff] %v799
    %864 = vst [vmem:[#allocation9 + $0x48] sm:$0xff] %v800
    %865 = vst [vmem:[#allocation9 + $0x50] sm:$0xff] %v801
    %866 = vst [vmem:[#allocation9 + $0x58] sm:$0xff] %v802
    %867 = vst [vmem:[#allocation9 + $0x60] sm:$0xff] %v803
    %868 = vst [vmem:[#allocation9 + $0x68] sm:$0xff] %v804
    %869 = vst [vmem:[#allocation9 + $0x70] sm:$0xff] %v805
    %870 = vst [vmem:[#allocation9 + $0x78] sm:$0xff] %v806
    %871 = vst [vmem:[#allocation9 + $0x80] sm:$0xff] %v807
    %872 = vst [vmem:[#allocation9 + $0x88] sm:$0xff] %v808
    %873 = vst [vmem:[#allocation9 + $0x90] sm:$0xff] %v809
    %874 = vst [vmem:[#allocation9 + $0x98] sm:$0xff] %v810
    %875 = vst [vmem:[#allocation9 + $0xa0] sm:$0xff] %v811
    %876 = vst [vmem:[#allocation9 + $0xa8] sm:$0xff] %v812
    %877 = vst [vmem:[#allocation9 + $0xb0] sm:$0xff] %v813
    %878 = vst [vmem:[#allocation9 + $0xb8] sm:$0xff] %v814
    %879 = vst [vmem:[#allocation9 + $0xc0] sm:$0xff] %v815
    %880 = vst [vmem:[#allocation9 + $0xc8] sm:$0xff] %v816
    %881 = vst [vmem:[#allocation9 + $0xd0] sm:$0xff] %v817
    %882 = vst [vmem:[#allocation9 + $0xd8] sm:$0xff] %v818
    %883 = vst [vmem:[#allocation9 + $0xe0] sm:$0xff] %v819
    %884 = vst [vmem:[#allocation9 + $0xe8] sm:$0xff] %v820
    %885 = vst [vmem:[#allocation9 + $0xf0] sm:$0xff] %v821
    %886 = vst [vmem:[#allocation9 + $0xf8] sm:$0xff] %v822
    %887 = vst [vmem:[#allocation9 + $0x100] sm:$0xff] %v823
    %888 = vst [vmem:[#allocation9 + $0x108] sm:$0xff] %v824
    %889 = vst [vmem:[#allocation9 + $0x110] sm:$0xff] %v825
    %890 = vst [vmem:[#allocation9 + $0x118] sm:$0xff] %v826
    %891 = vst [vmem:[#allocation9 + $0x120] sm:$0xff] %v827
    %892 = vst [vmem:[#allocation9 + $0x128] sm:$0xff] %v828
    %893 = vst [vmem:[#allocation9 + $0x130] sm:$0xff] %v829
    %894 = vst [vmem:[#allocation9 + $0x138] sm:$0xff] %v830
    %895 = vst [vmem:[#allocation9 + $0x140] sm:$0xff] %v831
    %896 = vst [vmem:[#allocation9 + $0x148] sm:$0xff] %v832
    %897 = vst [vmem:[#allocation9 + $0x150] sm:$0xff] %v833
    %898 = vst [vmem:[#allocation9 + $0x158] sm:$0xff] %v834
    %899 = vst [vmem:[#allocation9 + $0x160] sm:$0xff] %v835
    %900 = vst [vmem:[#allocation9 + $0x168] sm:$0xff] %v836
    %901 = vst [vmem:[#allocation9 + $0x170] sm:$0xff] %v837
    %902 = vst [vmem:[#allocation9 + $0x178] sm:$0xff] %v838
    %903 = vst [vmem:[#allocation9 + $0x180] sm:$0xff] %v839
    %904 = vst [vmem:[#allocation9 + $0x188] sm:$0xff] %v840
    %905 = vst [vmem:[#allocation9 + $0x190] sm:$0xff] %v841
    %906 = vst [vmem:[#allocation9 + $0x198] sm:$0xff] %v842
    %907 = vst [vmem:[#allocation9 + $0x1a0] sm:$0xff] %v843
    %908 = vst [vmem:[#allocation9 + $0x1a8] sm:$0xff] %v844
    %909 = vst [vmem:[#allocation9 + $0x1b0] sm:$0xff] %v845
    %910 = vst [vmem:[#allocation9 + $0x1b8] sm:$0xff] %v846
    %911 = vst [vmem:[#allocation9 + $0x1c0] sm:$0xff] %v847
    %912 = vst [vmem:[#allocation9 + $0x1c8] sm:$0xff] %v848
    %913 = vst [vmem:[#allocation9 + $0x1d0] sm:$0xff] %v849
    %914 = vst [vmem:[#allocation9 + $0x1d8] sm:$0xff] %v850
    %915 = vst [vmem:[#allocation9 + $0x1e0] sm:$0xff] %v851
    %916 = vst [vmem:[#allocation9 + $0x1e8] sm:$0xff] %v852
    %917 = vst [vmem:[#allocation9 + $0x1f0] sm:$0xff] %v853
    %918 = vst [vmem:[#allocation9 + $0x1f8] sm:$0xff] %v854
    %v919 = vmin.f32 %v791, %v795
    %v920 = vmin.f32 %v792, %v796
    %v921 = vmin.f32 %v793, %v797
    %v922 = vmin.f32 %v794, %v798
    %v923 = vmin.f32 %v919, %v799
    %v924 = vmin.f32 %v920, %v800
    %v925 = vmin.f32 %v921, %v801
    %v926 = vmin.f32 %v922, %v802
    %v927 = vmin.f32 %v923, %v803
    %v928 = vmin.f32 %v924, %v804
    %v929 = vmin.f32 %v925, %v805
    %v930 = vmin.f32 %v926, %v806
    %v931 = vmin.f32 %v927, %v807
    %v932 = vmin.f32 %v928, %v808
    %v933 = vmin.f32 %v929, %v809
    %v934 = vmin.f32 %v930, %v810
    %v935 = vmin.f32 %v931, %v811
    %v936 = vmin.f32 %v932, %v812
    %v937 = vmin.f32 %v933, %v813
    %v938 = vmin.f32 %v934, %v814
    %v939 = vmin.f32 %v935, %v815
    %v940 = vmin.f32 %v936, %v816
    %v941 = vmin.f32 %v937, %v817
    %v942 = vmin.f32 %v938, %v818
    %v943 = vmin.f32 %v939, %v819
    %v944 = vmin.f32 %v940, %v820
    %v945 = vmin.f32 %v941, %v821
    %v946 = vmin.f32 %v942, %v822
    %v947 = vmin.f32 %v943, %v823
    %v948 = vmin.f32 %v944, %v824
    %v949 = vmin.f32 %v945, %v825
    %v950 = vmin.f32 %v946, %v826
    %v951 = vmin.f32 %v947, %v827
    %v952 = vmin.f32 %v948, %v828
    %v953 = vmin.f32 %v949, %v829
    %v954 = vmin.f32 %v950, %v830
    %v955 = vmin.f32 %v951, %v831
    %v956 = vmin.f32 %v952, %v832
    %v957 = vmin.f32 %v953, %v833
    %v958 = vmin.f32 %v954, %v834
    %v959 = vmin.f32 %v955, %v835
    %v960 = vmin.f32 %v956, %v836
    %v961 = vmin.f32 %v957, %v837
    %v962 = vmin.f32 %v958, %v838
    %v963 = vmin.f32 %v959, %v839
    %v964 = vmin.f32 %v960, %v840
    %v965 = vmin.f32 %v961, %v841
    %v966 = vmin.f32 %v962, %v842
    %v967 = vmin.f32 %v963, %v843
    %v968 = vmin.f32 %v964, %v844
    %v969 = vmin.f32 %v965, %v845
    %v970 = vmin.f32 %v966, %v846
    %v971 = vmin.f32 %v967, %v847
    %v972 = vmin.f32 %v968, %v848
    %v973 = vmin.f32 %v969, %v849
    %v974 = vmin.f32 %v970, %v850
    %v975 = vmin.f32 %v971, %v851
    %v976 = vmin.f32 %v972, %v852
    %v977 = vmin.f32 %v973, %v853
    %v978 = vmin.f32 %v974, %v854
    %v979 = vmin.f32 %v975, %v976
    %v980 = vmin.f32 %v977, %v978
    %v981 = vmin.f32 %v979, %v980
    %982 = vmin.xlane.f32.xlu0 %v981
    %v983 = vpop.xlane.xlu0 %982
    %v984 = vrot.slane %v983, 4
    %v985 = vmin.f32 %v983, %v984
    %v986 = vrot.slane %v985, 2
    %v987 = vmin.f32 %v985, %v986
    %v988 = vrot.slane %v987, 1
    %v989 = vmin.f32 %v987, %v988
    %s990 = vtos %v989
    %v991 = vmax.f32 %v791, %v795
    %v992 = vmax.f32 %v792, %v796
    %v993 = vmax.f32 %v793, %v797
    %v994 = vmax.f32 %v794, %v798
    %v995 = vmax.f32 %v991, %v799
    %v996 = vmax.f32 %v992, %v800
    %v997 = vmax.f32 %v993, %v801
    %v998 = vmax.f32 %v994, %v802
    %v999 = vmax.f32 %v995, %v803
    %v1000 = vmax.f32 %v996, %v804
    %v1001 = vmax.f32 %v997, %v805
    %v1002 = vmax.f32 %v998, %v806
    %v1003 = vmax.f32 %v999, %v807
    %v1004 = vmax.f32 %v1000, %v808
    %v1005 = vmax.f32 %v1001, %v809
    %v1006 = vmax.f32 %v1002, %v810
    %v1007 = vmax.f32 %v1003, %v811
    %v1008 = vmax.f32 %v1004, %v812
    %v1009 = vmax.f32 %v1005, %v813
    %v1010 = vmax.f32 %v1006, %v814
    %v1011 = vmax.f32 %v1007, %v815
    %v1012 = vmax.f32 %v1008, %v816
    %v1013 = vmax.f32 %v1009, %v817
    %v1014 = vmax.f32 %v1010, %v818
    %v1015 = vmax.f32 %v1011, %v819
    %v1016 = vmax.f32 %v1012, %v820
    %v1017 = vmax.f32 %v1013, %v821
    %v1018 = vmax.f32 %v1014, %v822
    %v1019 = vmax.f32 %v1015, %v823
    %v1020 = vmax.f32 %v1016, %v824
    %v1021 = vmax.f32 %v1017, %v825
    %v1022 = vmax.f32 %v1018, %v826
    %v1023 = vmax.f32 %v1019, %v827
    %v1024 = vmax.f32 %v1020, %v828
    %v1025 = vmax.f32 %v1021, %v829
    %v1026 = vmax.f32 %v1022, %v830
    %v1027 = vmax.f32 %v1023, %v831
    %v1028 = vmax.f32 %v1024, %v832
    %v1029 = vmax.f32 %v1025, %v833
    %v1030 = vmax.f32 %v1026, %v834
    %v1031 = vmax.f32 %v1027, %v835
    %v1032 = vmax.f32 %v1028, %v836
    %v1033 = vmax.f32 %v1029, %v837
    %v1034 = vmax.f32 %v1030, %v838
    %v1035 = vmax.f32 %v1031, %v839
    %v1036 = vmax.f32 %v1032, %v840
    %v1037 = vmax.f32 %v1033, %v841
    %v1038 = vmax.f32 %v1034, %v842
    %v1039 = vmax.f32 %v1035, %v843
    %v1040 = vmax.f32 %v1036, %v844
    %v1041 = vmax.f32 %v1037, %v845
    %v1042 = vmax.f32 %v1038, %v846
    %v1043 = vmax.f32 %v1039, %v847
    %v1044 = vmax.f32 %v1040, %v848
    %v1045 = vmax.f32 %v1041, %v849
    %v1046 = vmax.f32 %v1042, %v850
    %v1047 = vmax.f32 %v1043, %v851
    %v1048 = vmax.f32 %v1044, %v852
    %v1049 = vmax.f32 %v1045, %v853
    %v1050 = vmax.f32 %v1046, %v854
    %v1051 = vmax.f32 %v1047, %v1048
    %v1052 = vmax.f32 %v1049, %v1050
    %v1053 = vmax.f32 %v1051, %v1052
    %1054 = vmax.xlane.f32.xlu0 %v1053
    %v1055 = vpop.xlane.xlu0 %1054
    %v1056 = vrot.slane %v1055, 4
    %v1057 = vmax.f32 %v1055, %v1056
    %v1058 = vrot.slane %v1057, 2
    %v1059 = vmax.f32 %v1057, %v1058
    %v1060 = vrot.slane %v1059, 1
    %v1061 = vmax.f32 %v1059, %v1060
    %s1062 = vtos %v1061
    %v1063 = vlaneseq
    %v1064 = vshrl.u32 %v1063, 7
    %vm1065 = vcmp.eq.s32.totalorder %v1064, 0
    %vm1066 = vcmp.eq.s32.totalorder %v1064, 1
    %v1067 = vstv %s1062
    %v1068 = vsel %vm1066, %v1067, 0.0
    %v1069 = vstv %s990
    %v1070 = vsel %vm1065, %v1069, %v1068
    %1071 = vst [vmem:[#allocation10] sm:$0xff] %v1070
    // Predicated region
    $region30: #{tpu_custom_call.1} parent=1 // pred_check
      _
    $region31: #{tpu_custom_call.1} parent=1 // pred_check_branch
      %1073 = sbr.rel (0) target = $region33
    $region32: #{tpu_custom_call.1} parent=1 // pred_region
      %1075 = vsyncadd [#allocation4], 0
      %s1076 = sshll.u32 [#allocation9], 4
      %s1077 = int_to_ptr.vmem [resolvable:$true] %s1076
      %s1078 = sshll.u32 %s4, 4
      %s1079 = int_to_ptr.hbm [resolvable:$true] %s1078
      %1084 = dma.vmem_to_hbm [thread:$0]  %s1077, 8192, %s1079, [#allocation4], 128, 128, 8
    $region33: #{tpu_custom_call.1} parent=1 // pred_fallthru
      _
    // Predicated region
    $region34: #{tpu_custom_call.1} parent=1 // pred_check
      _
    $region35: #{tpu_custom_call.1} parent=1 // pred_check_branch
      %1086 = sbr.rel (0) target = $region37
    $region36: #{tpu_custom_call.1} parent=1 // pred_region
      %1088 = vsyncadd [#allocation11], 0
      %s1090 = sshll.u32 [#allocation10], 4
      %s1091 = int_to_ptr.vmem [resolvable:$true] %s1090
      %s1092 = sshll.u32 %s5, 4
      %s1093 = int_to_ptr.hbm [resolvable:$true] %s1092
      %1095 = dma.vmem_to_hbm [thread:$0]  %s1091, 128, %s1093, [#allocation11]
    $region37: #{tpu_custom_call.1} parent=1 // pred_fallthru
      _
    // Predicated region
    $region38: #{tpu_custom_call.1} parent=1 // pred_check
      _
    $region39: #{tpu_custom_call.1} parent=1 // pred_check_branch
      %1097 = sbr.rel (0) target = $region41
    $region40: #{tpu_custom_call.1} parent=1 // pred_region
      %1099 = dma.done [#allocation4], 8192
    $region41: #{tpu_custom_call.1} parent=1 // pred_fallthru
      _
    // Predicated region
    $region42: #{tpu_custom_call.1} parent=1 // pred_check
      _
    $region43: #{tpu_custom_call.1} parent=1 // pred_check_branch
      %1101 = sbr.rel (0) target = $region45
    $region44: #{tpu_custom_call.1} parent=1 // pred_region
      %1103 = dma.done [#allocation11], 128
    $region45: #{tpu_custom_call.1} parent=1 // pred_fallthru
      _
    %1104 = vsyncpa [#allocation3], 1
    %1105 = vsyncpa [#allocation8], 1
    %1106 = vsyncpa [#allocation4], 1
    %1107 = vsyncpa [#allocation11], 1
    %1108 = vsyncpa [#allocation5], 1

</llo_original>
